<compile_context>
chip_gen: v6e
topology: v6e:2x2x1
jax: 0.10.0
libtpu: 0.0.40
codegen_flags: <defaults>
</compile_context>

<pallas_src>
import jax
import jax.numpy as jnp
from jax.experimental import pallas as pl
from jax.experimental.pallas import tpu as pltpu


def _elu(x):
    # ELU(alpha=1): x if x > 0 else exp(x) - 1.  No clamp: the overflowed exp lives
    # only in the discarded where branch (inference forward only).
    return jnp.where(x > 0, x, jnp.exp(x) - 1.0)


def vsn_kernel(
    xe_ref,      # (bm, F+S+1)      [x_t | ticker_emb | 1] block, matmul dtype
    w1e_ref,     # (F+S+1, F*d_h)   expanded per-feature Linear(1, d_h) + folded b1
    w2bd_ref,    # (F*d_h, F*d_h)   block-diagonal per-feature Linear(d_h, d_h), no bias
    b2mat_ref,   # (F, d_h)  f32    second-layer biases, folded via w @ b2mat
    wg1_ref,     # (F+S+1, d_h)     merged weight-generator first Linear + folded bg1
    wg2_ref,     # (d_h, F)         weight-generator second Linear (in, out)
    bg2_ref,     # (1, F)    f32
    erep_ref,    # (F, F*d_h) f32   0/1 feature-weight replication matrix
    ssum_ref,    # (F*d_h, d_h) f32 0/1 feature-sum matrix
    out_ref,     # (bm, d_h)
):
    mm = w1e_ref.dtype                 # matmul operand dtype (f32 or bf16)
    xe = xe_ref[...]                   # already in mm dtype; no per-step cast pass

    # ---- weight generator: softmax(Linear(ELU(Linear([x|emb])))) over F ----
    g1 = _elu(jnp.dot(xe, wg1_ref[...], preferred_element_type=jnp.float32))      # (bm, d_h)
    logits = jnp.dot(g1.astype(mm), wg2_ref[...],
                     preferred_element_type=jnp.float32) + bg2_ref[...]           # (bm, F)
    m = jnp.max(logits, axis=-1, keepdims=True)
    e = jnp.exp(logits - m)
    w = e * pl.reciprocal(jnp.sum(e, axis=-1, keepdims=True), approx=True)        # (bm, F) f32

    # ---- all per-feature MLPs fused into one lane-dense (bm, F*d_h) slab ----
    h1 = _elu(jnp.dot(xe, w1e_ref[...], preferred_element_type=jnp.float32))      # (bm, F*d_h)
    # TODO(synk): nn.Dropout(p=0.5) omitted (inference/eval semantics -> identity)
    h2 = jnp.dot(h1.astype(mm), w2bd_ref[...],
                 preferred_element_type=jnp.float32)                              # (bm, F*d_h)

    # ---- weighted sum over features (selection path kept f32 for accuracy) ----
    w_rep = jnp.dot(w, erep_ref[...], preferred_element_type=jnp.float32)         # (bm, F*d_h)
    out = jnp.dot(h2 * w_rep, ssum_ref[...], preferred_element_type=jnp.float32)  # (bm, d_h)
    out = out + jnp.dot(w, b2mat_ref[...], preferred_element_type=jnp.float32)    # folded b2
    out_ref[...] = out.astype(out_ref.dtype)


def pack_params(params, matmul_dtype=jnp.float32):
    """Pre-pack PyTorch-layout params into MXU-friendly fused matrices (done once)."""
    w1, b1 = params["w1"], params["b1"]           # (F, d_h), (F, d_h)
    w2t, b2 = params["w2t"], params["b2"]         # (F, d_h, d_h), (F, d_h)
    F, d_h = w1.shape
    S = params["wg1e"].shape[0]
    eye_f = jnp.eye(F, dtype=jnp.float32)

    # [x|emb|1] @ w1e == per-feature x[:, j] * w1[j] + b1[j]; emb rows are zero,
    # the constant-1 row carries the folded b1.
    w1e_x = (eye_f[:, :, None] * w1[:, None, :]).reshape(F, F * d_h)
    w1e = jnp.concatenate(
        [w1e_x, jnp.zeros((S, F * d_h), jnp.float32), b1.reshape(1, F * d_h)], axis=0)
    # Block-diagonal second-layer weight (F*d_h, F*d_h); bias folded later via w@b2mat.
    w2bd = (eye_f[:, None, :, None] * w2t[:, :, None, :]).reshape(F * d_h, F * d_h)
    # Feature-weight replication (F, F*d_h) and feature-sum (F*d_h, d_h) matrices (f32).
    erep = jnp.repeat(eye_f, d_h, axis=1)
    ssum = jnp.tile(jnp.eye(d_h, dtype=jnp.float32), (F, 1))
    # Merged weight-generator first layer: rows = [x part ; emb part ; folded bg1].
    wg1 = jnp.concatenate(
        [params["wg1x"], params["wg1e"], params["bg1"].reshape(1, d_h)], axis=0)

    md = matmul_dtype
    return {
        "w1e": w1e.astype(md),
        "w2bd": w2bd.astype(md),
        "b2mat": b2.astype(jnp.float32),          # (F, d_h), applied as w @ b2mat
        "wg1": wg1.astype(md),
        "wg2": params["wg2t"].astype(md),
        "bg2": params["bg2"].astype(jnp.float32),
        "erep": erep,                              # f32 (selection-path accuracy)
        "ssum": ssum,                              # f32
    }


def _round_up(x, m):
    return ((x + m - 1) // m) * m


def _batch_tiling(B, block_b, min_grid):
    """Pick (bm, Bp, grid): bm multiple of 16, grid >= min_grid (v7x 2-TC sharding)."""
    bm = min(int(block_b), max(16, _round_up(-(-B // max(min_grid, 1)), 16)))
    bm = _round_up(bm, 16)
    Bp = _round_up(B, bm)
    grid_len = max(Bp // bm, min_grid)
    return bm, bm * grid_len, grid_len


def vsn_forward(x_t, ticker_emb, packed, *, block_b=1024, min_grid=2):
    """Run the VSN forward pass: x_t (B, F), ticker_emb (B, S) -> (B, d_h)."""
    B = x_t.shape[0]
    d_h = packed["wg1"].shape[-1]
    mm = packed["w1e"].dtype

    # [x | emb | 1]; the constant-1 column carries the folded b1 / bg1 biases.
    xe = jnp.concatenate(
        [x_t.astype(jnp.float32), ticker_emb.astype(jnp.float32),
         jnp.ones((B, 1), jnp.float32)], axis=1)

    bm, Bp, grid_len = _batch_tiling(B, block_b, min_grid)
    if Bp != B:
        xe = jnp.pad(xe, ((0, Bp - B), (0, 0)))   # zero rows -> finite softmax, discarded
    xe = xe.astype(mm)                            # activation stream in matmul dtype

    weights = (packed["w1e"], packed["w2bd"], packed["b2mat"], packed["wg1"],
               packed["wg2"], packed["bg2"], packed["erep"], packed["ssum"])

    def const_spec(a):
        # Constant index_map -> weight block stays resident in VMEM across the grid.
        # TODO(synk): add pipeline_mode=pl.Buffered(1) if MLIR shows double-buffering.
        return pl.BlockSpec(a.shape, lambda i: (0,) * a.ndim)

    # Explicit VMEM budget (v5e default scoped limit is 16 MiB): resident weights
    # (x2 headroom) + pipelined activation/output blocks, clamped to a safe range.
    bytes_needed = 2 * sum(int(a.size) * a.dtype.itemsize for a in weights)
    bytes_needed += 3 * (bm * xe.shape[1] * xe.dtype.itemsize + bm * d_h * 4)
    vmem_limit = int(min(max(2 * bytes_needed, 32 << 20), 64 << 20))

    out = pl.pallas_call(
        vsn_kernel,
        out_shape=jax.ShapeDtypeStruct((Bp, d_h), jnp.float32),
        grid=(grid_len,),
        in_specs=[pl.BlockSpec((bm, xe.shape[1]), lambda i: (i, 0))]
                 + [const_spec(a) for a in weights],
        out_specs=pl.BlockSpec((bm, d_h), lambda i: (i, 0)),
        compiler_params=pltpu.CompilerParams(
            dimension_semantics=("parallel",),     # shard B grid across TCs (v7x)
            vmem_limit_bytes=vmem_limit),
    )(xe, *weights)
    return out[:B]


def vsn_reference(x_t, ticker_emb, params):
    """Pure-JAX reference mirroring the PyTorch forward (eval mode)."""
    F = x_t.shape[1]
    feats = []
    for j in range(F):
        h1 = _elu(x_t[:, j:j + 1] * params["w1"][j][None, :] + params["b1"][j][None, :])
        h2 = h1 @ params["w2t"][j] + params["b2"][j][None, :]
        feats.append(h2)
    features = jnp.stack(feats, axis=1)                         # (B, F, d_h)
    g1 = _elu(x_t @ params["wg1x"] + ticker_emb @ params["wg1e"] + params["bg1"])
    logits = g1 @ params["wg2t"] + params["bg2"]
    w = jax.nn.softmax(logits, axis=-1)                         # (B, F)
    return jnp.sum(features * w[:, :, None], axis=1)            # (B, d_h)


def make_params(key, num_features, d_h, static_dim):
    ks = jax.random.split(key, 8)
    scale = 0.1
    return {
        "w1": scale * jax.random.normal(ks[0], (num_features, d_h), jnp.float32),
        "b1": scale * jax.random.normal(ks[1], (num_features, d_h), jnp.float32),
        "w2t": scale * jax.random.normal(ks[2], (num_features, d_h, d_h), jnp.float32),
        "b2": scale * jax.random.normal(ks[3], (num_features, d_h), jnp.float32),
        "wg1x": scale * jax.random.normal(ks[4], (num_features, d_h), jnp.float32),
        "wg1e": scale * jax.random.normal(ks[5], (static_dim, d_h), jnp.float32),
        "bg1": scale * jax.random.normal(ks[6], (1, d_h), jnp.float32),
        "wg2t": scale * jax.random.normal(ks[7], (d_h, num_features), jnp.float32),
        "bg2": jnp.zeros((1, num_features), jnp.float32),
    }


if __name__ == "__main__":
    B, F, S, d_h = 8, 4, 8, 32

    ks = jax.random.split(jax.random.PRNGKey(0), 5)
    x_t = jax.random.normal(ks[0], (B, F), jnp.float32)
    ticker_emb = jax.random.normal(ks[1], (B, S), jnp.float32)
    params = make_params(ks[2], F, d_h, S)
    ref = jax.block_until_ready(vsn_reference(x_t, ticker_emb, params))

    # f32 matmul operands (small-batch path: grid padded to 2 steps for v7x TCs).
    out32 = jax.block_until_ready(
        vsn_forward(x_t, ticker_emb, pack_params(params, jnp.float32)))
    assert out32.shape == (B, d_h)
    assert jnp.allclose(out32, ref, atol=5e-3, rtol=5e-3), (
        f"f32 max abs err = {jnp.max(jnp.abs(out32 - ref))}")

    # bf16 matmul operands + bf16 activation stream; selection path stays f32.
    out16 = jax.block_until_ready(
        vsn_forward(x_t, ticker_emb, pack_params(params, jnp.bfloat16)))
    assert jnp.allclose(out16, ref, atol=3e-2, rtol=3e-2), (
        f"bf16 max abs err = {jnp.max(jnp.abs(out16 - ref))}")

    # Larger batch to exercise multi-step pipelined grid + batch padding.
    B2 = 200
    x2 = jax.random.normal(ks[3], (B2, F), jnp.float32)
    e2 = jax.random.normal(ks[4], (B2, S), jnp.float32)
    ref2 = jax.block_until_ready(vsn_reference(x2, e2, params))
    out2 = jax.block_until_ready(
        vsn_forward(x2, e2, pack_params(params, jnp.float32), block_b=64))
    assert out2.shape == (B2, d_h)
    assert jnp.allclose(out2, ref2, atol=5e-3, rtol=5e-3), (
        f"grid-path max abs err = {jnp.max(jnp.abs(out2 - ref2))}")

    print("KERNEL_OK")
</pallas_src>

<mosaic_0001>
module attributes {stable_mosaic.version = 11 : i64} {
  func.func @vsn_kernel(%arg0: i32, %arg1: memref<16x13xf32, #tpu.memory_space<vmem>>, %arg2: memref<13x128xf32, #tpu.memory_space<vmem>>, %arg3: memref<128x128xf32, #tpu.memory_space<vmem>>, %arg4: memref<4x32xf32, #tpu.memory_space<vmem>>, %arg5: memref<13x32xf32, #tpu.memory_space<vmem>>, %arg6: memref<32x4xf32, #tpu.memory_space<vmem>>, %arg7: memref<1x4xf32, #tpu.memory_space<vmem>>, %arg8: memref<4x128xf32, #tpu.memory_space<vmem>>, %arg9: memref<128x32xf32, #tpu.memory_space<vmem>>, %arg10: memref<16x32xf32, #tpu.memory_space<vmem>>) attributes {dimension_semantics = [#tpu.dimension_semantics<parallel>], iteration_bounds = array<i64: 2>, scalar_prefetch = 0 : i64, scratch_operands = 0 : i64, tpu.core_type = #tpu.core_type<tc>, window_params = [{transform_indices = @transform_0, window_bounds = array<i64: 16, 13>}, {pipeline_mode = #tpu.pipeline_mode<synchronous>, transform_indices = @transform_1, window_bounds = array<i64: 13, 128>}, {pipeline_mode = #tpu.pipeline_mode<synchronous>, transform_indices = @transform_2, window_bounds = array<i64: 128, 128>}, {pipeline_mode = #tpu.pipeline_mode<synchronous>, transform_indices = @transform_3, window_bounds = array<i64: 4, 32>}, {pipeline_mode = #tpu.pipeline_mode<synchronous>, transform_indices = @transform_4, window_bounds = array<i64: 13, 32>}, {pipeline_mode = #tpu.pipeline_mode<synchronous>, transform_indices = @transform_5, window_bounds = array<i64: 32, 4>}, {pipeline_mode = #tpu.pipeline_mode<synchronous>, transform_indices = @transform_6, window_bounds = array<i64: 1, 4>}, {pipeline_mode = #tpu.pipeline_mode<synchronous>, transform_indices = @transform_7, window_bounds = array<i64: 4, 128>}, {pipeline_mode = #tpu.pipeline_mode<synchronous>, transform_indices = @transform_8, window_bounds = array<i64: 128, 32>}, {transform_indices = @transform_9, window_bounds = array<i64: 16, 32>}]} {
    %c0 = arith.constant 0 : index
    %c0_0 = arith.constant 0 : index
    %0 = vector.load %arg1[%c0, %c0_0] : memref<16x13xf32, #tpu.memory_space<vmem>>, vector<16x13xf32>
    %c0_1 = arith.constant 0 : index
    %c0_2 = arith.constant 0 : index
    %1 = vector.load %arg5[%c0_1, %c0_2] : memref<13x32xf32, #tpu.memory_space<vmem>>, vector<13x32xf32>
    %cst = arith.constant dense<0.000000e+00> : vector<16x32xf32>
    %2 = tpu.matmul %0, %1, %cst {dimension_numbers = #tpu.dot_dimension_numbers<[1], [0], [0], [1], [0, 0, 1, 1], [], []>} : vector<16x13xf32>, vector<13x32xf32>, vector<16x32xf32> -> vector<16x32xf32>
    %cst_3 = arith.constant 0.000000e+00 : f32
    %3 = vector.broadcast %cst_3 : f32 to vector<16x32xf32>
    %4 = arith.cmpf ogt, %2, %3 : vector<16x32xf32>
    %5 = math.exp %2 : vector<16x32xf32>
    %cst_4 = arith.constant 1.000000e+00 : f32
    %6 = vector.broadcast %cst_4 : f32 to vector<16x32xf32>
    %7 = arith.subf %5, %6 : vector<16x32xf32>
    %8 = arith.select %4, %2, %7 : vector<16x32xi1>, vector<16x32xf32>
    %c0_5 = arith.constant 0 : index
    %c0_6 = arith.constant 0 : index
    %9 = vector.load %arg6[%c0_5, %c0_6] : memref<32x4xf32, #tpu.memory_space<vmem>>, vector<32x4xf32>
    %cst_7 = arith.constant dense<0.000000e+00> : vector<16x4xf32>
    %10 = tpu.matmul %8, %9, %cst_7 {dimension_numbers = #tpu.dot_dimension_numbers<[1], [0], [0], [1], [0, 0, 1, 1], [], []>} : vector<16x32xf32>, vector<32x4xf32>, vector<16x4xf32> -> vector<16x4xf32>
    %c0_8 = arith.constant 0 : index
    %c0_9 = arith.constant 0 : index
    %11 = vector.load %arg7[%c0_8, %c0_9] : memref<1x4xf32, #tpu.memory_space<vmem>>, vector<1x4xf32>
    %12 = vector.broadcast %11 : vector<1x4xf32> to vector<16x4xf32>
    %13 = arith.addf %10, %12 : vector<16x4xf32>
    %cst_10 = arith.constant dense<0xFF800000> : vector<16xf32>
    %14 = vector.multi_reduction <maximumf>, %13, %cst_10 [1] : vector<16x4xf32> to vector<16xf32>
    %15 = vector.shape_cast %14 : vector<16xf32> to vector<16x1xf32>
    %16 = vector.broadcast %15 : vector<16x1xf32> to vector<16x4xf32>
    %17 = arith.subf %13, %16 : vector<16x4xf32>
    %18 = math.exp %17 : vector<16x4xf32>
    %cst_11 = arith.constant dense<0.000000e+00> : vector<16xf32>
    %19 = vector.multi_reduction <add>, %18, %cst_11 [1] : vector<16x4xf32> to vector<16xf32>
    %20 = vector.shape_cast %19 : vector<16xf32> to vector<16x1xf32>
    %21 = tpu.reciprocal %20 {approx = true} : vector<16x1xf32> -> vector<16x1xf32>
    %22 = vector.broadcast %21 : vector<16x1xf32> to vector<16x4xf32>
    %23 = arith.mulf %18, %22 : vector<16x4xf32>
    %c0_12 = arith.constant 0 : index
    %c0_13 = arith.constant 0 : index
    %24 = vector.load %arg2[%c0_12, %c0_13] : memref<13x128xf32, #tpu.memory_space<vmem>>, vector<13x128xf32>
    %cst_14 = arith.constant dense<0.000000e+00> : vector<16x128xf32>
    %25 = tpu.matmul %0, %24, %cst_14 {dimension_numbers = #tpu.dot_dimension_numbers<[1], [0], [0], [1], [0, 0, 1, 1], [], []>} : vector<16x13xf32>, vector<13x128xf32>, vector<16x128xf32> -> vector<16x128xf32>
    %cst_15 = arith.constant 0.000000e+00 : f32
    %26 = vector.broadcast %cst_15 : f32 to vector<16x128xf32>
    %27 = arith.cmpf ogt, %25, %26 : vector<16x128xf32>
    %28 = math.exp %25 : vector<16x128xf32>
    %cst_16 = arith.constant 1.000000e+00 : f32
    %29 = vector.broadcast %cst_16 : f32 to vector<16x128xf32>
    %30 = arith.subf %28, %29 : vector<16x128xf32>
    %31 = arith.select %27, %25, %30 : vector<16x128xi1>, vector<16x128xf32>
    %c0_17 = arith.constant 0 : index
    %c0_18 = arith.constant 0 : index
    %32 = vector.load %arg3[%c0_17, %c0_18] : memref<128x128xf32, #tpu.memory_space<vmem>>, vector<128x128xf32>
    %cst_19 = arith.constant dense<0.000000e+00> : vector<16x128xf32>
    %33 = tpu.matmul %31, %32, %cst_19 {dimension_numbers = #tpu.dot_dimension_numbers<[1], [0], [0], [1], [0, 0, 1, 1], [], []>} : vector<16x128xf32>, vector<128x128xf32>, vector<16x128xf32> -> vector<16x128xf32>
    %c0_20 = arith.constant 0 : index
    %c0_21 = arith.constant 0 : index
    %34 = vector.load %arg8[%c0_20, %c0_21] : memref<4x128xf32, #tpu.memory_space<vmem>>, vector<4x128xf32>
    %cst_22 = arith.constant dense<0.000000e+00> : vector<16x128xf32>
    %35 = tpu.matmul %23, %34, %cst_22 {dimension_numbers = #tpu.dot_dimension_numbers<[1], [0], [0], [1], [0, 0, 1, 1], [], []>} : vector<16x4xf32>, vector<4x128xf32>, vector<16x128xf32> -> vector<16x128xf32>
    %36 = arith.mulf %33, %35 : vector<16x128xf32>
    %c0_23 = arith.constant 0 : index
    %c0_24 = arith.constant 0 : index
    %37 = vector.load %arg9[%c0_23, %c0_24] : memref<128x32xf32, #tpu.memory_space<vmem>>, vector<128x32xf32>
    %cst_25 = arith.constant dense<0.000000e+00> : vector<16x32xf32>
    %38 = tpu.matmul %36, %37, %cst_25 {dimension_numbers = #tpu.dot_dimension_numbers<[1], [0], [0], [1], [0, 0, 1, 1], [], []>} : vector<16x128xf32>, vector<128x32xf32>, vector<16x32xf32> -> vector<16x32xf32>
    %c0_26 = arith.constant 0 : index
    %c0_27 = arith.constant 0 : index
    %39 = vector.load %arg4[%c0_26, %c0_27] : memref<4x32xf32, #tpu.memory_space<vmem>>, vector<4x32xf32>
    %cst_28 = arith.constant dense<0.000000e+00> : vector<16x32xf32>
    %40 = tpu.matmul %23, %39, %cst_28 {dimension_numbers = #tpu.dot_dimension_numbers<[1], [0], [0], [1], [0, 0, 1, 1], [], []>} : vector<16x4xf32>, vector<4x32xf32>, vector<16x32xf32> -> vector<16x32xf32>
    %41 = arith.addf %38, %40 : vector<16x32xf32>
    %c0_29 = arith.constant 0 : index
    %c0_30 = arith.constant 0 : index
    %42 = vector.load %arg10[%c0_29, %c0_30] : memref<16x32xf32, #tpu.memory_space<vmem>>, vector<16x32xf32>
    tpu.vector_store %arg10[%c0_29, %c0_30], %41 {strides = array<i32>} : memref<16x32xf32, #tpu.memory_space<vmem>>, vector<16x32xf32>,
    return
  }
  func.func @transform_0(%arg0: i32) -> (i32, i32) {
    %c0_i32 = arith.constant 0 : i32
    %c0_i32_0 = arith.constant 0 : i32
    return %arg0, %c0_i32 : i32, i32
  }
  func.func @transform_1(%arg0: i32) -> (i32, i32) {
    %c0_i32 = arith.constant 0 : i32
    %c0_i32_0 = arith.constant 0 : i32
    %c0_i32_1 = arith.constant 0 : i32
    return %c0_i32, %c0_i32_0 : i32, i32
  }
  func.func @transform_2(%arg0: i32) -> (i32, i32) {
    %c0_i32 = arith.constant 0 : i32
    %c0_i32_0 = arith.constant 0 : i32
    %c0_i32_1 = arith.constant 0 : i32
    return %c0_i32, %c0_i32_0 : i32, i32
  }
  func.func @transform_3(%arg0: i32) -> (i32, i32) {
    %c0_i32 = arith.constant 0 : i32
    %c0_i32_0 = arith.constant 0 : i32
    %c0_i32_1 = arith.constant 0 : i32
    return %c0_i32, %c0_i32_0 : i32, i32
  }
  func.func @transform_4(%arg0: i32) -> (i32, i32) {
    %c0_i32 = arith.constant 0 : i32
    %c0_i32_0 = arith.constant 0 : i32
    %c0_i32_1 = arith.constant 0 : i32
    return %c0_i32, %c0_i32_0 : i32, i32
  }
  func.func @transform_5(%arg0: i32) -> (i32, i32) {
    %c0_i32 = arith.constant 0 : i32
    %c0_i32_0 = arith.constant 0 : i32
    %c0_i32_1 = arith.constant 0 : i32
    return %c0_i32, %c0_i32_0 : i32, i32
  }
  func.func @transform_6(%arg0: i32) -> (i32, i32) {
    %c0_i32 = arith.constant 0 : i32
    %c0_i32_0 = arith.constant 0 : i32
    %c0_i32_1 = arith.constant 0 : i32
    return %c0_i32, %c0_i32_0 : i32, i32
  }
  func.func @transform_7(%arg0: i32) -> (i32, i32) {
    %c0_i32 = arith.constant 0 : i32
    %c0_i32_0 = arith.constant 0 : i32
    %c0_i32_1 = arith.constant 0 : i32
    return %c0_i32, %c0_i32_0 : i32, i32
  }
  func.func @transform_8(%arg0: i32) -> (i32, i32) {
    %c0_i32 = arith.constant 0 : i32
    %c0_i32_0 = arith.constant 0 : i32
    %c0_i32_1 = arith.constant 0 : i32
    return %c0_i32, %c0_i32_0 : i32, i32
  }
  func.func @transform_9(%arg0: i32) -> (i32, i32) {
    %c0_i32 = arith.constant 0 : i32
    %c0_i32_0 = arith.constant 0 : i32
    return %arg0, %c0_i32 : i32, i32
  }
}

</mosaic_0001>

<llo_original>
// kernel: tpu_custom_call.1
$region0: #{tpu_custom_call.1}
  #allocation0 [shape = 'u32[]', space=smem, size = 0x4, offset = 0x4, fixed_abs, tag = 'smem constant byte address 0x4 - core index']
  #allocation1 [shape = 'u32[144,128]{1,0:T(1,128)}', space=vmem, size = 0x12000, scoped, tag = 'internal scratch']
  %s0 = inlined_call_operand.vmem [shape: f32[32,13], index: 0, kind: input, shape index: {}]
  %s1 = inlined_call_operand.vmem [shape: f32[13,128], index: 1, kind: input, shape index: {}]
  %s2 = inlined_call_operand.vmem [shape: f32[128,128], index: 2, kind: input, shape index: {}]
  %s3 = inlined_call_operand.vmem [shape: f32[4,32], index: 3, kind: input, shape index: {}]
  %s4 = inlined_call_operand.vmem [shape: f32[13,32], index: 4, kind: input, shape index: {}]
  %s5 = inlined_call_operand.vmem [shape: f32[32,4], index: 5, kind: input, shape index: {}]
  %s6 = inlined_call_operand.vmem [shape: f32[1,4], index: 6, kind: input, shape index: {}]
  %s7 = inlined_call_operand.vmem [shape: f32[4,128], index: 7, kind: input, shape index: {}]
  %s8 = inlined_call_operand.vmem [shape: f32[128,32], index: 8, kind: input, shape index: {}]
  %s9 = inlined_call_operand.hbm [shape: f32[32,32], index: 9, kind: output, shape index: {}]
  %s10 = sld [smem:[#allocation0]]
  $region69: #{tpu_custom_call.1} parent=0
    _
  %s12 = ssub.s32 1, %s10
  %s13 = scalar_select 0, %s12, %s10
  $region1: #{tpu_custom_call.1} parent=0
    #allocation2 [shape = 'u8[16384]{0}', space=vmem, size = 0x4000, scoped, tag = 'output window, operand 0']
    #allocation3 [shape = 's32[2]{0}', space=sflag, size = 0x8, scoped, tag = 'scoped memory for tpu_custom_call.1']
    %14 = vsyncpa [#allocation3], 0
    %s15 = scalar_lea.sflag [#allocation3], 1
    %16 = vsyncpa %s15, 0
    loop: start=0, step=1, limit=4
    $region2: #{tpu_custom_call.1} parent=1 // loop_pre_header
      _
    $region3: #{tpu_custom_call.1} parent=1 // loop_header
      %s18 = sphi 0, %s22
      %p19 = scmp.ge.s32.totalorder %s18, 4
      %s28 = sphi 0, %s30
      %s31 = sphi 0, %s28
      %s32 = sphi 0, %s31
      %s48 = sphi 0, %s32
      %s52 = sphi 0, %s52
      %s54 = sphi 0, %s52
      %s55 = sphi 0, %s54
      %s69 = sphi 0, %s55
      %s73 = sphi 0, %s73
      %s75 = sphi 0, %s73
      %s76 = sphi 0, %s75
      %s90 = sphi 0, %s76
      %s94 = sphi 0, %s94
      %s96 = sphi 0, %s94
      %s97 = sphi 0, %s96
      %s111 = sphi 0, %s97
      %s115 = sphi 0, %s115
      %s117 = sphi 0, %s115
      %s118 = sphi 0, %s117
      %s132 = sphi 0, %s118
      %s136 = sphi 0, %s136
      %s138 = sphi 0, %s136
      %s139 = sphi 0, %s138
      %s153 = sphi 0, %s139
      %s157 = sphi 0, %s157
      %s159 = sphi 0, %s157
      %s160 = sphi 0, %s159
      %s174 = sphi 0, %s160
      %s178 = sphi 0, %s178
      %s180 = sphi 0, %s178
      %s181 = sphi 0, %s180
      %s195 = sphi 0, %s181
      %s199 = sphi 0, %s199
      %s201 = sphi 0, %s199
      %s202 = sphi 0, %s201
      %s216 = sphi 0, %s202
      %s222 = sphi 0, %s224
      %s225 = sphi 0, %s222
      %s226 = sphi 0, %s225
      %s242 = sphi 0, %s226
    $region4: #{tpu_custom_call.1} parent=1 // loop_header_branch
      %21 = sbr.rel (%p19) target = $region8
    $region5: #{tpu_custom_call.1} parent=1 // loop_body
      %s23 = ssub.s32 %s18, 1
      %s24 = ssub.s32 %s18, 2
      %s25 = sadd.s32 %s18, 1
      %s26 = ssub.s32 %s18, %s25
      %p27 = scmp.eq.s32.totalorder %s26, 0
      %s29 = sadd.s32 %s28, 1
      %s30 = scalar_select %p27, %s28, %s29
      %p33 = pneg %p27
      %p34 = scmp.eq.s32.totalorder %s18, 1
      %p35 = por %p33, %p34
      %p36 = scmp.ne.s32.totalorder %s28, %s31
      %p37 = scmp.eq.s32.totalorder %s18, 0
      %p38 = por %p36, %p37
      %p39 = scmp.ne.s32.totalorder %s28, %s31
      %p40 = scmp.eq.s32.totalorder %s23, 1
      %p41 = por %p39, %p40
      %p42 = scmp.ne.s32.totalorder %s31, %s32
      %p43 = scmp.eq.s32.totalorder %s23, 0
      %p44 = por %p42, %p43
      %p45 = scmp.ne.s32.totalorder %s31, %s32
      %p46 = scmp.eq.s32.totalorder %s24, 1
      %p47 = por %p45, %p46
      %p49 = scmp.ne.s32.totalorder %s32, %s48
      %p50 = scmp.eq.s32.totalorder %s24, 0
      %p51 = por %p49, %p50
      %s53 = sadd.s32 %s52, 1
      %p56 = scmp.eq.s32.totalorder %s18, 1
      %p57 = scmp.ne.s32.totalorder %s52, %s54
      %p58 = scmp.eq.s32.totalorder %s18, 0
      %p59 = por %p57, %p58
      %p60 = scmp.ne.s32.totalorder %s52, %s54
      %p61 = scmp.eq.s32.totalorder %s23, 1
      %p62 = por %p60, %p61
      %p63 = scmp.ne.s32.totalorder %s54, %s55
      %p64 = scmp.eq.s32.totalorder %s23, 0
      %p65 = por %p63, %p64
      %p66 = scmp.ne.s32.totalorder %s54, %s55
      %p67 = scmp.eq.s32.totalorder %s24, 1
      %p68 = por %p66, %p67
      %p70 = scmp.ne.s32.totalorder %s55, %s69
      %p71 = scmp.eq.s32.totalorder %s24, 0
      %p72 = por %p70, %p71
      %s74 = sadd.s32 %s73, 1
      %p77 = scmp.eq.s32.totalorder %s18, 1
      %p78 = scmp.ne.s32.totalorder %s73, %s75
      %p79 = scmp.eq.s32.totalorder %s18, 0
      %p80 = por %p78, %p79
      %p81 = scmp.ne.s32.totalorder %s73, %s75
      %p82 = scmp.eq.s32.totalorder %s23, 1
      %p83 = por %p81, %p82
      %p84 = scmp.ne.s32.totalorder %s75, %s76
      %p85 = scmp.eq.s32.totalorder %s23, 0
      %p86 = por %p84, %p85
      %p87 = scmp.ne.s32.totalorder %s75, %s76
      %p88 = scmp.eq.s32.totalorder %s24, 1
      %p89 = por %p87, %p88
      %p91 = scmp.ne.s32.totalorder %s76, %s90
      %p92 = scmp.eq.s32.totalorder %s24, 0
      %p93 = por %p91, %p92
      %s95 = sadd.s32 %s94, 1
      %p98 = scmp.eq.s32.totalorder %s18, 1
      %p99 = scmp.ne.s32.totalorder %s94, %s96
      %p100 = scmp.eq.s32.totalorder %s18, 0
      %p101 = por %p99, %p100
      %p102 = scmp.ne.s32.totalorder %s94, %s96
      %p103 = scmp.eq.s32.totalorder %s23, 1
      %p104 = por %p102, %p103
      %p105 = scmp.ne.s32.totalorder %s96, %s97
      %p106 = scmp.eq.s32.totalorder %s23, 0
      %p107 = por %p105, %p106
      %p108 = scmp.ne.s32.totalorder %s96, %s97
      %p109 = scmp.eq.s32.totalorder %s24, 1
      %p110 = por %p108, %p109
      %p112 = scmp.ne.s32.totalorder %s97, %s111
      %p113 = scmp.eq.s32.totalorder %s24, 0
      %p114 = por %p112, %p113
      %s116 = sadd.s32 %s115, 1
      %p119 = scmp.eq.s32.totalorder %s18, 1
      %p120 = scmp.ne.s32.totalorder %s115, %s117
      %p121 = scmp.eq.s32.totalorder %s18, 0
      %p122 = por %p120, %p121
      %p123 = scmp.ne.s32.totalorder %s115, %s117
      %p124 = scmp.eq.s32.totalorder %s23, 1
      %p125 = por %p123, %p124
      %p126 = scmp.ne.s32.totalorder %s117, %s118
      %p127 = scmp.eq.s32.totalorder %s23, 0
      %p128 = por %p126, %p127
      %p129 = scmp.ne.s32.totalorder %s117, %s118
      %p130 = scmp.eq.s32.totalorder %s24, 1
      %p131 = por %p129, %p130
      %p133 = scmp.ne.s32.totalorder %s118, %s132
      %p134 = scmp.eq.s32.totalorder %s24, 0
      %p135 = por %p133, %p134
      %s137 = sadd.s32 %s136, 1
      %p140 = scmp.eq.s32.totalorder %s18, 1
      %p141 = scmp.ne.s32.totalorder %s136, %s138
      %p142 = scmp.eq.s32.totalorder %s18, 0
      %p143 = por %p141, %p142
      %p144 = scmp.ne.s32.totalorder %s136, %s138
      %p145 = scmp.eq.s32.totalorder %s23, 1
      %p146 = por %p144, %p145
      %p147 = scmp.ne.s32.totalorder %s138, %s139
      %p148 = scmp.eq.s32.totalorder %s23, 0
      %p149 = por %p147, %p148
      %p150 = scmp.ne.s32.totalorder %s138, %s139
      %p151 = scmp.eq.s32.totalorder %s24, 1
      %p152 = por %p150, %p151
      %p154 = scmp.ne.s32.totalorder %s139, %s153
      %p155 = scmp.eq.s32.totalorder %s24, 0
      %p156 = por %p154, %p155
      %s158 = sadd.s32 %s157, 1
      %p161 = scmp.eq.s32.totalorder %s18, 1
      %p162 = scmp.ne.s32.totalorder %s157, %s159
      %p163 = scmp.eq.s32.totalorder %s18, 0
      %p164 = por %p162, %p163
      %p165 = scmp.ne.s32.totalorder %s157, %s159
      %p166 = scmp.eq.s32.totalorder %s23, 1
      %p167 = por %p165, %p166
      %p168 = scmp.ne.s32.totalorder %s159, %s160
      %p169 = scmp.eq.s32.totalorder %s23, 0
      %p170 = por %p168, %p169
      %p171 = scmp.ne.s32.totalorder %s159, %s160
      %p172 = scmp.eq.s32.totalorder %s24, 1
      %p173 = por %p171, %p172
      %p175 = scmp.ne.s32.totalorder %s160, %s174
      %p176 = scmp.eq.s32.totalorder %s24, 0
      %p177 = por %p175, %p176
      %s179 = sadd.s32 %s178, 1
      %p182 = scmp.eq.s32.totalorder %s18, 1
      %p183 = scmp.ne.s32.totalorder %s178, %s180
      %p184 = scmp.eq.s32.totalorder %s18, 0
      %p185 = por %p183, %p184
      %p186 = scmp.ne.s32.totalorder %s178, %s180
      %p187 = scmp.eq.s32.totalorder %s23, 1
      %p188 = por %p186, %p187
      %p189 = scmp.ne.s32.totalorder %s180, %s181
      %p190 = scmp.eq.s32.totalorder %s23, 0
      %p191 = por %p189, %p190
      %p192 = scmp.ne.s32.totalorder %s180, %s181
      %p193 = scmp.eq.s32.totalorder %s24, 1
      %p194 = por %p192, %p193
      %p196 = scmp.ne.s32.totalorder %s181, %s195
      %p197 = scmp.eq.s32.totalorder %s24, 0
      %p198 = por %p196, %p197
      %s200 = sadd.s32 %s199, 1
      %p203 = scmp.eq.s32.totalorder %s18, 1
      %p204 = scmp.ne.s32.totalorder %s199, %s201
      %p205 = scmp.eq.s32.totalorder %s18, 0
      %p206 = por %p204, %p205
      %p207 = scmp.ne.s32.totalorder %s199, %s201
      %p208 = scmp.eq.s32.totalorder %s23, 1
      %p209 = por %p207, %p208
      %p210 = scmp.ne.s32.totalorder %s201, %s202
      %p211 = scmp.eq.s32.totalorder %s23, 0
      %p212 = por %p210, %p211
      %p213 = scmp.ne.s32.totalorder %s201, %s202
      %p214 = scmp.eq.s32.totalorder %s24, 1
      %p215 = por %p213, %p214
      %p217 = scmp.ne.s32.totalorder %s202, %s216
      %p218 = scmp.eq.s32.totalorder %s24, 0
      %p219 = por %p217, %p218
      %s220 = ssub.s32 %s18, %s25
      %p221 = scmp.eq.s32.totalorder %s220, 0
      %s223 = sadd.s32 %s222, 1
      %s224 = scalar_select %p221, %s222, %s223
      %p227 = pneg %p221
      %p228 = scmp.eq.s32.totalorder %s18, 1
      %p229 = por %p227, %p228
      %p230 = scmp.ne.s32.totalorder %s222, %s225
      %p231 = scmp.eq.s32.totalorder %s18, 0
      %p232 = por %p230, %p231
      %p233 = scmp.ne.s32.totalorder %s222, %s225
      %p234 = scmp.eq.s32.totalorder %s23, 1
      %p235 = por %p233, %p234
      %p236 = scmp.ne.s32.totalorder %s225, %s226
      %p237 = scmp.eq.s32.totalorder %s23, 0
      %p238 = por %p236, %p237
      %p239 = scmp.ne.s32.totalorder %s225, %s226
      %p240 = scmp.eq.s32.totalorder %s24, 1
      %p241 = por %p239, %p240
      %p243 = scmp.ne.s32.totalorder %s226, %s242
      %p244 = scmp.eq.s32.totalorder %s24, 0
      %p245 = por %p243, %p244
      %p246 = scmp.le.s32.totalorder 1, %s18
      %p247 = scmp.lt.s32.totalorder %s18, 3
      %p248 = pnand %p246, %p247
      %p249 = pneg %p248
      // Predicated region
      $region9: #{tpu_custom_call.1} parent=5 // pred_check
        _
      $region10: #{tpu_custom_call.1} parent=5 // pred_check_branch
        %251 = sbr.rel (%p248) target = $region12
      $region11: #{tpu_custom_call.1} parent=5 // pred_region
        %s252 = ssub.s32 %s18, 1
        // Predicated region
        $region13: #{tpu_custom_call.1} parent=11 // pred_check
          %p253 = pneg %p65
        $region14: #{tpu_custom_call.1} parent=11 // pred_check_branch
          %255 = sbr.rel (%p253) target = $region16
        $region15: #{tpu_custom_call.1} parent=11 // pred_region
          _
        $region16: #{tpu_custom_call.1} parent=11 // pred_fallthru
          _
        // Predicated region
        $region17: #{tpu_custom_call.1} parent=11 // pred_check
          %p256 = pneg %p86
        $region18: #{tpu_custom_call.1} parent=11 // pred_check_branch
          %258 = sbr.rel (%p256) target = $region20
        $region19: #{tpu_custom_call.1} parent=11 // pred_region
          _
        $region20: #{tpu_custom_call.1} parent=11 // pred_fallthru
          _
        // Predicated region
        $region21: #{tpu_custom_call.1} parent=11 // pred_check
          %p259 = pneg %p107
        $region22: #{tpu_custom_call.1} parent=11 // pred_check_branch
          %261 = sbr.rel (%p259) target = $region24
        $region23: #{tpu_custom_call.1} parent=11 // pred_region
          _
        $region24: #{tpu_custom_call.1} parent=11 // pred_fallthru
          _
        // Predicated region
        $region25: #{tpu_custom_call.1} parent=11 // pred_check
          %p262 = pneg %p128
        $region26: #{tpu_custom_call.1} parent=11 // pred_check_branch
          %264 = sbr.rel (%p262) target = $region28
        $region27: #{tpu_custom_call.1} parent=11 // pred_region
          _
        $region28: #{tpu_custom_call.1} parent=11 // pred_fallthru
          _
        // Predicated region
        $region29: #{tpu_custom_call.1} parent=11 // pred_check
          %p265 = pneg %p149
        $region30: #{tpu_custom_call.1} parent=11 // pred_check_branch
          %267 = sbr.rel (%p265) target = $region32
        $region31: #{tpu_custom_call.1} parent=11 // pred_region
          _
        $region32: #{tpu_custom_call.1} parent=11 // pred_fallthru
          _
        // Predicated region
        $region33: #{tpu_custom_call.1} parent=11 // pred_check
          %p268 = pneg %p170
        $region34: #{tpu_custom_call.1} parent=11 // pred_check_branch
          %270 = sbr.rel (%p268) target = $region36
        $region35: #{tpu_custom_call.1} parent=11 // pred_region
          _
        $region36: #{tpu_custom_call.1} parent=11 // pred_fallthru
          _
        // Predicated region
        $region37: #{tpu_custom_call.1} parent=11 // pred_check
          %p271 = pneg %p191
        $region38: #{tpu_custom_call.1} parent=11 // pred_check_branch
          %273 = sbr.rel (%p271) target = $region40
        $region39: #{tpu_custom_call.1} parent=11 // pred_region
          _
        $region40: #{tpu_custom_call.1} parent=11 // pred_fallthru
          _
        // Predicated region
        $region41: #{tpu_custom_call.1} parent=11 // pred_check
          %p274 = pneg %p212
        $region42: #{tpu_custom_call.1} parent=11 // pred_check_branch
          %276 = sbr.rel (%p274) target = $region44
        $region43: #{tpu_custom_call.1} parent=11 // pred_region
          _
        $region44: #{tpu_custom_call.1} parent=11 // pred_fallthru
          _
      $region12: #{tpu_custom_call.1} parent=5 // pred_fallthru
        _
      %p277 = scmp.lt.s32.totalorder %s18, 2
      // Predicated region
      $region45: #{tpu_custom_call.1} parent=5 // pred_check
        %p278 = pneg %p277
      $region46: #{tpu_custom_call.1} parent=5 // pred_check_branch
        %280 = sbr.rel (%p278) target = $region48
      $region47: #{tpu_custom_call.1} parent=5 // pred_region
        // Predicated region
        $region49: #{tpu_custom_call.1} parent=47 // pred_check
          %p281 = pneg %p38
        $region50: #{tpu_custom_call.1} parent=47 // pred_check_branch
          %283 = sbr.rel (%p281) target = $region52
        $region51: #{tpu_custom_call.1} parent=47 // pred_region
          %s284 = smul.u32 2, %s18
          %p285 = scmp.lt.s32.totalorder %s284, 3
          %s286 = scalar_select %p285, %s284, 3
          %s287 = smul.addr %s286, 8
          %s288 = scalar_lea.vmem %s0, %s287
          %s289 = smul.u32 2, %s18
        $region52: #{tpu_custom_call.1} parent=47 // pred_fallthru
          _
      $region48: #{tpu_custom_call.1} parent=5 // pred_fallthru
        _
      %p290 = scmp.le.s32.totalorder 1, %s18
      %p291 = scmp.lt.s32.totalorder %s18, 3
      %p292 = pnand %p290, %p291
      %p293 = pneg %p292
      // Predicated region
      $region53: #{tpu_custom_call.1} parent=5 // pred_check
        _
      $region54: #{tpu_custom_call.1} parent=5 // pred_check_branch
        %295 = sbr.rel (%p292) target = $region56
      $region55: #{tpu_custom_call.1} parent=5 // pred_region
        %s296 = ssub.s32 %s18, 1
        %s297 = smul.u32 2, %s23
        %p298 = scmp.lt.s32.totalorder %s297, 3
        %s299 = scalar_select %p298, %s297, 3
        %s300 = smul.addr %s299, 8
        %s301 = scalar_lea.vmem %s0, %s300
        %p302 = pneg %p44
        %p303 = pneg %p41
        %p304 = pneg %p65
        %p305 = pneg %p62
        %p306 = pneg %p86
        %p307 = pneg %p83
        %p308 = pneg %p107
        %p309 = pneg %p104
        %p310 = pneg %p128
        %p311 = pneg %p125
        %p312 = pneg %p149
        %p313 = pneg %p146
        %p314 = pneg %p170
        %p315 = pneg %p167
        %p316 = pneg %p191
        %p317 = pneg %p188
        %p318 = pneg %p212
        %p319 = pneg %p209
        %p320 = pneg %p238
        %p321 = pneg %p235
        %s322 = sand.u32 %s225, 1
        %s323 = scalar_lea.sflag [#allocation3], %s322
        %s324 = sand.u32 %s225, 1
        %s325 = smul.addr %s324, 16
        %s326 = scalar_lea.vmem [#allocation2], %s325
        %s327 = smul.u32 2, %s23
        %p328 = scmp.lt.s32.totalorder %s327, 3
        %s329 = scalar_select %p328, %s327, 3
        %s330 = smul.addr %s329, 8
        %s331 = scalar_lea.vmem %s0, %s330
        %s332 = smul.u32 2, %s23
        %s333 = smul.u32 2, %s23
        %v334 = vld [vmem:[%s331] sm:$0xff]
        %v335 = vld [vmem:[%s331 + $0x8] sm:$0xff]
        %v336 = vld [vmem:[%s4] sm:$0xff]
        %v337 = vld [vmem:[%s4 + $0x8] sm:$0x1f]
        %vm338 = vcmask 105472
        %v340 = vsel %vm338, %v334, 0
        %v343 = vsel %vm338, %v335, 0
        %vm345 = vcmask 1044480
        %v347 = vsel %vm345, %v337, 0
        %349 = vmatprep.subr.mxu0 0.0
        %350 = vmatpush1.msra.mxu0 0.0
        %351 = vmatprep.subr.mxu0 0.0
        %352 = vmatpush1.msra.mxu0 0.0
        %353 = vmatprep.subr.mxu0 0.0
        %354 = vmatpush1.msra.mxu0 0.0
        %355 = vmatprep.subr.mxu0 0.0
        %356 = vmatpush1.msra.mxu0 0.0
        %357 = vmatprep.subr.mxu0 0.0
        %358 = vmatpush1.msra.mxu0 0.0
        %359 = vmatprep.subr.mxu0 0.0
        %360 = vmatpush1.msra.mxu0 0.0
        %361 = vmatprep.subr.mxu0 0.0
        %362 = vmatpush1.msra.mxu0 0.0
        %363 = vmatprep.subr.mxu0 0.0
        %364 = vmatpush1.msra.mxu0 0.0
        %365 = vmatprep.subr.mxu0 0.0
        %366 = vmatpush1.msra.mxu0 0.0
        %367 = vmatprep.subr.mxu0 0.0
        %368 = vmatpush1.msra.mxu0 0.0
        %369 = vmatprep.subr.mxu0 0.0
        %370 = vmatpush1.msra.mxu0 0.0
        %371 = vmatprep.subr.mxu0 0.0
        %372 = vmatpush1.msra.mxu0 0.0
        %373 = vmatprep.subr.mxu0 0.0
        %374 = vmatpush1.msra.mxu0 0.0
        %375 = vmatprep.subr.mxu0 0.0
        %376 = vmatpush1.msra.mxu0 0.0
        %377 = vmatprep.subr.mxu0 0.0
        %378 = vmatpush1.msra.mxu0 %v347
        %379 = vmatprep.subr.mxu0 0.0
        %380 = vmatpush1.msra.mxu0 %v336
        %381 = vmatprep.subr.mxu0 0.0
        %382 = vmatpush2.msra.mxu0 0.0
        %383 = vmatprep.subr.mxu0 0.0
        %384 = vmatpush2.msra.mxu0 0.0
        %385 = vmatprep.subr.mxu0 0.0
        %386 = vmatpush2.msra.mxu0 0.0
        %387 = vmatprep.subr.mxu0 0.0
        %388 = vmatpush2.msra.mxu0 0.0
        %389 = vmatprep.subr.mxu0 0.0
        %390 = vmatpush2.msra.mxu0 0.0
        %391 = vmatprep.subr.mxu0 0.0
        %392 = vmatpush2.msra.mxu0 0.0
        %393 = vmatprep.subr.mxu0 0.0
        %394 = vmatpush2.msra.mxu0 0.0
        %395 = vmatprep.subr.mxu0 0.0
        %396 = vmatpush2.msra.mxu0 0.0
        %397 = vmatprep.subr.mxu0 0.0
        %398 = vmatpush2.msra.mxu0 0.0
        %399 = vmatprep.subr.mxu0 0.0
        %400 = vmatpush2.msra.mxu0 0.0
        %401 = vmatprep.subr.mxu0 0.0
        %402 = vmatpush2.msra.mxu0 0.0
        %403 = vmatprep.subr.mxu0 0.0
        %404 = vmatpush2.msra.mxu0 0.0
        %405 = vmatprep.subr.mxu0 0.0
        %406 = vmatpush2.msra.mxu0 0.0
        %407 = vmatprep.subr.mxu0 0.0
        %408 = vmatpush2.msra.mxu0 0.0
        %409 = vmatprep.subr.mxu0 0.0
        %410 = vmatpush2.msra.mxu0 0.0
        %411 = vmatprep.subr.mxu0 0.0
        %412 = vmatpush2.msra.mxu0 0.0
        %413 = vmatprep.mubr.f32.mxu0 0.0
        %414 = vmatmul.mubr.f32.gmra.mxu0 %v340
        %v415 = vpop.f32.mrf.mxu0
        %v416 = vadd.f32 0.0, %v415
        %v417 = vpop.f32.mrf.mxu0
        %418 = vmatprep.mubr.f32.mxu0 0.0
        %419 = vmatmul.mubr.f32.gmra.mxu0 %v343
        %v420 = vpop.f32.mrf.mxu0
        %v421 = vadd.f32 0.0, %v420
        %v422 = vpop.f32.mrf.mxu0
        %423 = vdwg.mxu0
        %vm424 = vcmp.gt.f32.partialorder %v416, 0.0
        %vm425 = vcmp.gt.f32.partialorder %v421, 0.0
        %v426 = vmul.f32 %v416, 1.442695
        %v427 = vpow.pop %v426
        %v428 = vmul.f32 %v421, 1.442695
        %v429 = vpow.pop %v428
        %v430 = vsub.f32 %v427, 1.0
        %v431 = vsub.f32 %v429, 1.0
        %v432 = vsel %vm424, %v416, %v430
        %v433 = vsel %vm425, %v421, %v431
        %v434 = vld [vmem:[%s5] sm:$0xff]
        %v435 = vld [vmem:[%s5 + $0x8] sm:$0xff]
        %v436 = vld [vmem:[%s5 + $0x10] sm:$0xff]
        %v437 = vld [vmem:[%s5 + $0x18] sm:$0xff]
        %v438 = vld [vmem:[%s6] sm:$0x1]
        %v440 = vlaneseq
        %v441 = vshrl.u32 %v440, 7
        %v442 = vsub.s32 0, %v441
        %v443 = vrot.slane %v438, %v442
        %vm445 = vcmask 261120
        %v447 = vsel %vm445, %v432, 0
        %v450 = vsel %vm445, %v433, 0
        %452 = vmatprep.subr.mxu0 0.0
        %453 = vmatpush1.msra.mxu0 0.0
        %454 = vmatprep.subr.mxu0 0.0
        %455 = vmatpush1.msra.mxu0 0.0
        %456 = vmatprep.subr.mxu0 0.0
        %457 = vmatpush1.msra.mxu0 0.0
        %458 = vmatprep.subr.mxu0 0.0
        %459 = vmatpush1.msra.mxu0 0.0
        %460 = vmatprep.subr.mxu0 0.0
        %461 = vmatpush1.msra.mxu0 0.0
        %462 = vmatprep.subr.mxu0 0.0
        %463 = vmatpush1.msra.mxu0 0.0
        %464 = vmatprep.subr.mxu0 0.0
        %465 = vmatpush1.msra.mxu0 0.0
        %466 = vmatprep.subr.mxu0 0.0
        %467 = vmatpush1.msra.mxu0 0.0
        %468 = vmatprep.subr.mxu0 0.0
        %469 = vmatpush1.msra.mxu0 0.0
        %470 = vmatprep.subr.mxu0 0.0
        %471 = vmatpush1.msra.mxu0 0.0
        %472 = vmatprep.subr.mxu0 0.0
        %473 = vmatpush1.msra.mxu0 0.0
        %474 = vmatprep.subr.mxu0 0.0
        %475 = vmatpush1.msra.mxu0 0.0
        %476 = vmatprep.subr.mxu0 0.0
        %477 = vmatpush1.msra.mxu0 %v437
        %478 = vmatprep.subr.mxu0 0.0
        %479 = vmatpush1.msra.mxu0 %v436
        %480 = vmatprep.subr.mxu0 0.0
        %481 = vmatpush1.msra.mxu0 %v435
        %482 = vmatprep.subr.mxu0 0.0
        %483 = vmatpush1.msra.mxu0 %v434
        %484 = vmatprep.subr.mxu0 0.0
        %485 = vmatpush2.msra.mxu0 0.0
        %486 = vmatprep.subr.mxu0 0.0
        %487 = vmatpush2.msra.mxu0 0.0
        %488 = vmatprep.subr.mxu0 0.0
        %489 = vmatpush2.msra.mxu0 0.0
        %490 = vmatprep.subr.mxu0 0.0
        %491 = vmatpush2.msra.mxu0 0.0
        %492 = vmatprep.subr.mxu0 0.0
        %493 = vmatpush2.msra.mxu0 0.0
        %494 = vmatprep.subr.mxu0 0.0
        %495 = vmatpush2.msra.mxu0 0.0
        %496 = vmatprep.subr.mxu0 0.0
        %497 = vmatpush2.msra.mxu0 0.0
        %498 = vmatprep.subr.mxu0 0.0
        %499 = vmatpush2.msra.mxu0 0.0
        %500 = vmatprep.subr.mxu0 0.0
        %501 = vmatpush2.msra.mxu0 0.0
        %502 = vmatprep.subr.mxu0 0.0
        %503 = vmatpush2.msra.mxu0 0.0
        %504 = vmatprep.subr.mxu0 0.0
        %505 = vmatpush2.msra.mxu0 0.0
        %506 = vmatprep.subr.mxu0 0.0
        %507 = vmatpush2.msra.mxu0 0.0
        %508 = vmatprep.subr.mxu0 0.0
        %509 = vmatpush2.msra.mxu0 0.0
        %510 = vmatprep.subr.mxu0 0.0
        %511 = vmatpush2.msra.mxu0 0.0
        %512 = vmatprep.subr.mxu0 0.0
        %513 = vmatpush2.msra.mxu0 0.0
        %514 = vmatprep.subr.mxu0 0.0
        %515 = vmatpush2.msra.mxu0 0.0
        %516 = vmatprep.mubr.f32.mxu0 0.0
        %517 = vmatmul.mubr.f32.gmra.mxu0 %v447
        %v518 = vpop.f32.mrf.mxu0
        %v519 = vadd.f32 %v443, %v518
        %v520 = vpop.f32.mrf.mxu0
        %521 = vmatprep.mubr.f32.mxu0 0.0
        %522 = vmatmul.mubr.f32.gmra.mxu0 %v450
        %v523 = vpop.f32.mrf.mxu0
        %v524 = vadd.f32 %v443, %v523
        %v525 = vpop.f32.mrf.mxu0
        %526 = vdwg.mxu0
        %vm527 = vcmask 31744
        %v528 = vsel %vm527, %v519, -inf
        %529 = vmax.xlane.f32.xlu0 %v528
        %v530 = vpop.xlane.xlu0 %529
        %v531 = vsel %vm527, %v524, -inf
        %532 = vmax.xlane.f32.xlu0 %v531
        %v533 = vpop.xlane.xlu0 %532
        %v534 = vsub.f32 %v519, %v530
        %v535 = vsub.f32 %v524, %v533
        %v536 = vmul.f32 %v534, 1.442695
        %v537 = vpow.pop %v536
        %v538 = vmul.f32 %v535, 1.442695
        %v539 = vpow.pop %v538
        %v540 = vsel %vm527, %v537, 0.0
        %541 = vadd.xlane.f32.xlu0 %v540
        %v542 = vpop.xlane.xlu0 %541
        %v543 = vsel %vm527, %v539, 0.0
        %544 = vadd.xlane.f32.xlu0 %v543
        %v545 = vpop.xlane.xlu0 %544
        %v546 = vrcp.pop %v542
        %v547 = vrcp.pop %v545
        %v548 = vmul.f32 %v537, %v546
        %v549 = vmul.f32 %v539, %v547
        %v550 = vld [vmem:[%s1] sm:$0xff]
        %v551 = vld [vmem:[%s1 + $0x8] sm:$0x1f]
        %v553 = vsel %vm345, %v551, 0
        %555 = vmatprep.subr.mxu0 0.0
        %556 = vmatpush1.msra.mxu0 0.0
        %557 = vmatprep.subr.mxu0 0.0
        %558 = vmatpush1.msra.mxu0 0.0
        %559 = vmatprep.subr.mxu0 0.0
        %560 = vmatpush1.msra.mxu0 0.0
        %561 = vmatprep.subr.mxu0 0.0
        %562 = vmatpush1.msra.mxu0 0.0
        %563 = vmatprep.subr.mxu0 0.0
        %564 = vmatpush1.msra.mxu0 0.0
        %565 = vmatprep.subr.mxu0 0.0
        %566 = vmatpush1.msra.mxu0 0.0
        %567 = vmatprep.subr.mxu0 0.0
        %568 = vmatpush1.msra.mxu0 0.0
        %569 = vmatprep.subr.mxu0 0.0
        %570 = vmatpush1.msra.mxu0 0.0
        %571 = vmatprep.subr.mxu0 0.0
        %572 = vmatpush1.msra.mxu0 0.0
        %573 = vmatprep.subr.mxu0 0.0
        %574 = vmatpush1.msra.mxu0 0.0
        %575 = vmatprep.subr.mxu0 0.0
        %576 = vmatpush1.msra.mxu0 0.0
        %577 = vmatprep.subr.mxu0 0.0
        %578 = vmatpush1.msra.mxu0 0.0
        %579 = vmatprep.subr.mxu0 0.0
        %580 = vmatpush1.msra.mxu0 0.0
        %581 = vmatprep.subr.mxu0 0.0
        %582 = vmatpush1.msra.mxu0 0.0
        %583 = vmatprep.subr.mxu0 0.0
        %584 = vmatpush1.msra.mxu0 %v553
        %585 = vmatprep.subr.mxu0 0.0
        %586 = vmatpush1.msra.mxu0 %v550
        %587 = vmatprep.subr.mxu0 0.0
        %588 = vmatpush2.msra.mxu0 0.0
        %589 = vmatprep.subr.mxu0 0.0
        %590 = vmatpush2.msra.mxu0 0.0
        %591 = vmatprep.subr.mxu0 0.0
        %592 = vmatpush2.msra.mxu0 0.0
        %593 = vmatprep.subr.mxu0 0.0
        %594 = vmatpush2.msra.mxu0 0.0
        %595 = vmatprep.subr.mxu0 0.0
        %596 = vmatpush2.msra.mxu0 0.0
        %597 = vmatprep.subr.mxu0 0.0
        %598 = vmatpush2.msra.mxu0 0.0
        %599 = vmatprep.subr.mxu0 0.0
        %600 = vmatpush2.msra.mxu0 0.0
        %601 = vmatprep.subr.mxu0 0.0
        %602 = vmatpush2.msra.mxu0 0.0
        %603 = vmatprep.subr.mxu0 0.0
        %604 = vmatpush2.msra.mxu0 0.0
        %605 = vmatprep.subr.mxu0 0.0
        %606 = vmatpush2.msra.mxu0 0.0
        %607 = vmatprep.subr.mxu0 0.0
        %608 = vmatpush2.msra.mxu0 0.0
        %609 = vmatprep.subr.mxu0 0.0
        %610 = vmatpush2.msra.mxu0 0.0
        %611 = vmatprep.subr.mxu0 0.0
        %612 = vmatpush2.msra.mxu0 0.0
        %613 = vmatprep.subr.mxu0 0.0
        %614 = vmatpush2.msra.mxu0 0.0
        %615 = vmatprep.subr.mxu0 0.0
        %616 = vmatpush2.msra.mxu0 0.0
        %617 = vmatprep.subr.mxu0 0.0
        %618 = vmatpush2.msra.mxu0 0.0
        %619 = vmatprep.mubr.f32.mxu0 0.0
        %620 = vmatmul.mubr.f32.gmra.mxu0 %v340
        %v621 = vpop.f32.mrf.mxu0
        %v622 = vadd.f32 0.0, %v621
        %v623 = vpop.f32.mrf.mxu0
        %624 = vmatprep.mubr.f32.mxu0 0.0
        %625 = vmatmul.mubr.f32.gmra.mxu0 %v343
        %v626 = vpop.f32.mrf.mxu0
        %v627 = vadd.f32 0.0, %v626
        %v628 = vpop.f32.mrf.mxu0
        %629 = vdwg.mxu0
        %vm630 = vcmp.gt.f32.partialorder %v622, 0.0
        %vm631 = vcmp.gt.f32.partialorder %v627, 0.0
        %v632 = vmul.f32 %v622, 1.442695
        %v633 = vpow.pop %v632
        %v634 = vmul.f32 %v627, 1.442695
        %v635 = vpow.pop %v634
        %v636 = vsub.f32 %v633, 1.0
        %v637 = vsub.f32 %v635, 1.0
        %v638 = vsel %vm630, %v622, %v636
        %v639 = vsel %vm631, %v627, %v637
        %v640 = vld [vmem:[%s2] sm:$0xff]
        %v641 = vld [vmem:[%s2 + $0x8] sm:$0xff]
        %v642 = vld [vmem:[%s2 + $0x10] sm:$0xff]
        %v643 = vld [vmem:[%s2 + $0x18] sm:$0xff]
        %v644 = vld [vmem:[%s2 + $0x20] sm:$0xff]
        %v645 = vld [vmem:[%s2 + $0x28] sm:$0xff]
        %v646 = vld [vmem:[%s2 + $0x30] sm:$0xff]
        %v647 = vld [vmem:[%s2 + $0x38] sm:$0xff]
        %v648 = vld [vmem:[%s2 + $0x40] sm:$0xff]
        %v649 = vld [vmem:[%s2 + $0x48] sm:$0xff]
        %v650 = vld [vmem:[%s2 + $0x50] sm:$0xff]
        %v651 = vld [vmem:[%s2 + $0x58] sm:$0xff]
        %v652 = vld [vmem:[%s2 + $0x60] sm:$0xff]
        %v653 = vld [vmem:[%s2 + $0x68] sm:$0xff]
        %v654 = vld [vmem:[%s2 + $0x70] sm:$0xff]
        %v655 = vld [vmem:[%s2 + $0x78] sm:$0xff]
        %656 = vmatprep.subr.mxu0 0.0
        %657 = vmatpush1.msra.mxu0 %v655
        %658 = vmatprep.subr.mxu0 0.0
        %659 = vmatpush1.msra.mxu0 %v654
        %660 = vmatprep.subr.mxu0 0.0
        %661 = vmatpush1.msra.mxu0 %v653
        %662 = vmatprep.subr.mxu0 0.0
        %663 = vmatpush1.msra.mxu0 %v652
        %664 = vmatprep.subr.mxu0 0.0
        %665 = vmatpush1.msra.mxu0 %v651
        %666 = vmatprep.subr.mxu0 0.0
        %667 = vmatpush1.msra.mxu0 %v650
        %668 = vmatprep.subr.mxu0 0.0
        %669 = vmatpush1.msra.mxu0 %v649
        %670 = vmatprep.subr.mxu0 0.0
        %671 = vmatpush1.msra.mxu0 %v648
        %672 = vmatprep.subr.mxu0 0.0
        %673 = vmatpush1.msra.mxu0 %v647
        %674 = vmatprep.subr.mxu0 0.0
        %675 = vmatpush1.msra.mxu0 %v646
        %676 = vmatprep.subr.mxu0 0.0
        %677 = vmatpush1.msra.mxu0 %v645
        %678 = vmatprep.subr.mxu0 0.0
        %679 = vmatpush1.msra.mxu0 %v644
        %680 = vmatprep.subr.mxu0 0.0
        %681 = vmatpush1.msra.mxu0 %v643
        %682 = vmatprep.subr.mxu0 0.0
        %683 = vmatpush1.msra.mxu0 %v642
        %684 = vmatprep.subr.mxu0 0.0
        %685 = vmatpush1.msra.mxu0 %v641
        %686 = vmatprep.subr.mxu0 0.0
        %687 = vmatpush1.msra.mxu0 %v640
        %688 = vmatprep.subr.mxu0 0.0
        %689 = vmatpush2.msra.mxu0 0.0
        %690 = vmatprep.subr.mxu0 0.0
        %691 = vmatpush2.msra.mxu0 0.0
        %692 = vmatprep.subr.mxu0 0.0
        %693 = vmatpush2.msra.mxu0 0.0
        %694 = vmatprep.subr.mxu0 0.0
        %695 = vmatpush2.msra.mxu0 0.0
        %696 = vmatprep.subr.mxu0 0.0
        %697 = vmatpush2.msra.mxu0 0.0
        %698 = vmatprep.subr.mxu0 0.0
        %699 = vmatpush2.msra.mxu0 0.0
        %700 = vmatprep.subr.mxu0 0.0
        %701 = vmatpush2.msra.mxu0 0.0
        %702 = vmatprep.subr.mxu0 0.0
        %703 = vmatpush2.msra.mxu0 0.0
        %704 = vmatprep.subr.mxu0 0.0
        %705 = vmatpush2.msra.mxu0 0.0
        %706 = vmatprep.subr.mxu0 0.0
        %707 = vmatpush2.msra.mxu0 0.0
        %708 = vmatprep.subr.mxu0 0.0
        %709 = vmatpush2.msra.mxu0 0.0
        %710 = vmatprep.subr.mxu0 0.0
        %711 = vmatpush2.msra.mxu0 0.0
        %712 = vmatprep.subr.mxu0 0.0
        %713 = vmatpush2.msra.mxu0 0.0
        %714 = vmatprep.subr.mxu0 0.0
        %715 = vmatpush2.msra.mxu0 0.0
        %716 = vmatprep.subr.mxu0 0.0
        %717 = vmatpush2.msra.mxu0 0.0
        %718 = vmatprep.subr.mxu0 0.0
        %719 = vmatpush2.msra.mxu0 0.0
        %720 = vmatprep.mubr.f32.mxu0 0.0
        %721 = vmatmul.mubr.f32.gmra.mxu0 %v638
        %v722 = vpop.f32.mrf.mxu0
        %v723 = vadd.f32 0.0, %v722
        %v724 = vpop.f32.mrf.mxu0
        %725 = vmatprep.mubr.f32.mxu0 0.0
        %726 = vmatmul.mubr.f32.gmra.mxu0 %v639
        %v727 = vpop.f32.mrf.mxu0
        %v728 = vadd.f32 0.0, %v727
        %v729 = vpop.f32.mrf.mxu0
        %730 = vdwg.mxu0
        %v731 = vld [vmem:[%s7] sm:$0xf]
        %v733 = vsel %vm527, %v548, 0
        %v736 = vsel %vm527, %v549, 0
        %vm738 = vcmask 1043456
        %v740 = vsel %vm738, %v731, 0
        %742 = vmatprep.subr.mxu0 0.0
        %743 = vmatpush1.msra.mxu0 0.0
        %744 = vmatprep.subr.mxu0 0.0
        %745 = vmatpush1.msra.mxu0 0.0
        %746 = vmatprep.subr.mxu0 0.0
        %747 = vmatpush1.msra.mxu0 0.0
        %748 = vmatprep.subr.mxu0 0.0
        %749 = vmatpush1.msra.mxu0 0.0
        %750 = vmatprep.subr.mxu0 0.0
        %751 = vmatpush1.msra.mxu0 0.0
        %752 = vmatprep.subr.mxu0 0.0
        %753 = vmatpush1.msra.mxu0 0.0
        %754 = vmatprep.subr.mxu0 0.0
        %755 = vmatpush1.msra.mxu0 0.0
        %756 = vmatprep.subr.mxu0 0.0
        %757 = vmatpush1.msra.mxu0 0.0
        %758 = vmatprep.subr.mxu0 0.0
        %759 = vmatpush1.msra.mxu0 0.0
        %760 = vmatprep.subr.mxu0 0.0
        %761 = vmatpush1.msra.mxu0 0.0
        %762 = vmatprep.subr.mxu0 0.0
        %763 = vmatpush1.msra.mxu0 0.0
        %764 = vmatprep.subr.mxu0 0.0
        %765 = vmatpush1.msra.mxu0 0.0
        %766 = vmatprep.subr.mxu0 0.0
        %767 = vmatpush1.msra.mxu0 0.0
        %768 = vmatprep.subr.mxu0 0.0
        %769 = vmatpush1.msra.mxu0 0.0
        %770 = vmatprep.subr.mxu0 0.0
        %771 = vmatpush1.msra.mxu0 0.0
        %772 = vmatprep.subr.mxu0 0.0
        %773 = vmatpush1.msra.mxu0 %v740
        %774 = vmatprep.subr.mxu0 0.0
        %775 = vmatpush2.msra.mxu0 0.0
        %776 = vmatprep.subr.mxu0 0.0
        %777 = vmatpush2.msra.mxu0 0.0
        %778 = vmatprep.subr.mxu0 0.0
        %779 = vmatpush2.msra.mxu0 0.0
        %780 = vmatprep.subr.mxu0 0.0
        %781 = vmatpush2.msra.mxu0 0.0
        %782 = vmatprep.subr.mxu0 0.0
        %783 = vmatpush2.msra.mxu0 0.0
        %784 = vmatprep.subr.mxu0 0.0
        %785 = vmatpush2.msra.mxu0 0.0
        %786 = vmatprep.subr.mxu0 0.0
        %787 = vmatpush2.msra.mxu0 0.0
        %788 = vmatprep.subr.mxu0 0.0
        %789 = vmatpush2.msra.mxu0 0.0
        %790 = vmatprep.subr.mxu0 0.0
        %791 = vmatpush2.msra.mxu0 0.0
        %792 = vmatprep.subr.mxu0 0.0
        %793 = vmatpush2.msra.mxu0 0.0
        %794 = vmatprep.subr.mxu0 0.0
        %795 = vmatpush2.msra.mxu0 0.0
        %796 = vmatprep.subr.mxu0 0.0
        %797 = vmatpush2.msra.mxu0 0.0
        %798 = vmatprep.subr.mxu0 0.0
        %799 = vmatpush2.msra.mxu0 0.0
        %800 = vmatprep.subr.mxu0 0.0
        %801 = vmatpush2.msra.mxu0 0.0
        %802 = vmatprep.subr.mxu0 0.0
        %803 = vmatpush2.msra.mxu0 0.0
        %804 = vmatprep.subr.mxu0 0.0
        %805 = vmatpush2.msra.mxu0 0.0
        %806 = vmatprep.mubr.f32.mxu0 0.0
        %807 = vmatmul.mubr.f32.gmra.mxu0 %v733
        %v808 = vpop.f32.mrf.mxu0
        %v809 = vadd.f32 0.0, %v808
        %v810 = vpop.f32.mrf.mxu0
        %811 = vmatprep.mubr.f32.mxu0 0.0
        %812 = vmatmul.mubr.f32.gmra.mxu0 %v736
        %v813 = vpop.f32.mrf.mxu0
        %v814 = vadd.f32 0.0, %v813
        %v815 = vpop.f32.mrf.mxu0
        %816 = vdwg.mxu0
        %v817 = vmul.f32 %v723, %v809
        %v818 = vmul.f32 %v728, %v814
        %v819 = vld [vmem:[%s8] sm:$0xff]
        %v820 = vld [vmem:[%s8 + $0x8] sm:$0xff]
        %v821 = vld [vmem:[%s8 + $0x10] sm:$0xff]
        %v822 = vld [vmem:[%s8 + $0x18] sm:$0xff]
        %v823 = vld [vmem:[%s8 + $0x20] sm:$0xff]
        %v824 = vld [vmem:[%s8 + $0x28] sm:$0xff]
        %v825 = vld [vmem:[%s8 + $0x30] sm:$0xff]
        %v826 = vld [vmem:[%s8 + $0x38] sm:$0xff]
        %v827 = vld [vmem:[%s8 + $0x40] sm:$0xff]
        %v828 = vld [vmem:[%s8 + $0x48] sm:$0xff]
        %v829 = vld [vmem:[%s8 + $0x50] sm:$0xff]
        %v830 = vld [vmem:[%s8 + $0x58] sm:$0xff]
        %v831 = vld [vmem:[%s8 + $0x60] sm:$0xff]
        %v832 = vld [vmem:[%s8 + $0x68] sm:$0xff]
        %v833 = vld [vmem:[%s8 + $0x70] sm:$0xff]
        %v834 = vld [vmem:[%s8 + $0x78] sm:$0xff]
        %v835 = vld [vmem:[%s3] sm:$0xf]
        %v837 = vsel %vm738, %v835, 0
        %839 = vmatprep.subr.mxu0 0.0
        %840 = vmatpush1.msra.mxu0 0.0
        %841 = vmatprep.subr.mxu0 0.0
        %842 = vmatpush1.msra.mxu0 0.0
        %843 = vmatprep.subr.mxu0 0.0
        %844 = vmatpush1.msra.mxu0 0.0
        %845 = vmatprep.subr.mxu0 0.0
        %846 = vmatpush1.msra.mxu0 0.0
        %847 = vmatprep.subr.mxu0 0.0
        %848 = vmatpush1.msra.mxu0 0.0
        %849 = vmatprep.subr.mxu0 0.0
        %850 = vmatpush1.msra.mxu0 0.0
        %851 = vmatprep.subr.mxu0 0.0
        %852 = vmatpush1.msra.mxu0 0.0
        %853 = vmatprep.subr.mxu0 0.0
        %854 = vmatpush1.msra.mxu0 0.0
        %855 = vmatprep.subr.mxu0 0.0
        %856 = vmatpush1.msra.mxu0 0.0
        %857 = vmatprep.subr.mxu0 0.0
        %858 = vmatpush1.msra.mxu0 0.0
        %859 = vmatprep.subr.mxu0 0.0
        %860 = vmatpush1.msra.mxu0 0.0
        %861 = vmatprep.subr.mxu0 0.0
        %862 = vmatpush1.msra.mxu0 0.0
        %863 = vmatprep.subr.mxu0 0.0
        %864 = vmatpush1.msra.mxu0 0.0
        %865 = vmatprep.subr.mxu0 0.0
        %866 = vmatpush1.msra.mxu0 0.0
        %867 = vmatprep.subr.mxu0 0.0
        %868 = vmatpush1.msra.mxu0 0.0
        %869 = vmatprep.subr.mxu0 0.0
        %870 = vmatpush1.msra.mxu0 %v837
        %871 = vmatprep.subr.mxu0 0.0
        %872 = vmatpush2.msra.mxu0 0.0
        %873 = vmatprep.subr.mxu0 0.0
        %874 = vmatpush2.msra.mxu0 0.0
        %875 = vmatprep.subr.mxu0 0.0
        %876 = vmatpush2.msra.mxu0 0.0
        %877 = vmatprep.subr.mxu0 0.0
        %878 = vmatpush2.msra.mxu0 0.0
        %879 = vmatprep.subr.mxu0 0.0
        %880 = vmatpush2.msra.mxu0 0.0
        %881 = vmatprep.subr.mxu0 0.0
        %882 = vmatpush2.msra.mxu0 0.0
        %883 = vmatprep.subr.mxu0 0.0
        %884 = vmatpush2.msra.mxu0 0.0
        %885 = vmatprep.subr.mxu0 0.0
        %886 = vmatpush2.msra.mxu0 0.0
        %887 = vmatprep.subr.mxu0 0.0
        %888 = vmatpush2.msra.mxu0 0.0
        %889 = vmatprep.subr.mxu0 0.0
        %890 = vmatpush2.msra.mxu0 0.0
        %891 = vmatprep.subr.mxu0 0.0
        %892 = vmatpush2.msra.mxu0 0.0
        %893 = vmatprep.subr.mxu0 0.0
        %894 = vmatpush2.msra.mxu0 0.0
        %895 = vmatprep.subr.mxu0 0.0
        %896 = vmatpush2.msra.mxu0 0.0
        %897 = vmatprep.subr.mxu0 0.0
        %898 = vmatpush2.msra.mxu0 0.0
        %899 = vmatprep.subr.mxu0 0.0
        %900 = vmatpush2.msra.mxu0 0.0
        %901 = vmatprep.subr.mxu0 0.0
        %902 = vmatpush2.msra.mxu0 0.0
        %903 = vmatprep.mubr.f32.mxu0 0.0
        %904 = vmatmul.mubr.f32.gmra.mxu0 %v733
        %v905 = vpop.f32.mrf.mxu0
        %v906 = vadd.f32 0.0, %v905
        %v907 = vpop.f32.mrf.mxu0
        %908 = vmatprep.mubr.f32.mxu0 0.0
        %909 = vmatmul.mubr.f32.gmra.mxu0 %v736
        %v910 = vpop.f32.mrf.mxu0
        %v911 = vadd.f32 0.0, %v910
        %v912 = vpop.f32.mrf.mxu0
        %913 = vdwg.mxu0
        %914 = vmatprep.subr.mxu0 0.0
        %915 = vmatpush1.msra.mxu0 %v834
        %916 = vmatprep.subr.mxu0 0.0
        %917 = vmatpush1.msra.mxu0 %v833
        %918 = vmatprep.subr.mxu0 0.0
        %919 = vmatpush1.msra.mxu0 %v832
        %920 = vmatprep.subr.mxu0 0.0
        %921 = vmatpush1.msra.mxu0 %v831
        %922 = vmatprep.subr.mxu0 0.0
        %923 = vmatpush1.msra.mxu0 %v830
        %924 = vmatprep.subr.mxu0 0.0
        %925 = vmatpush1.msra.mxu0 %v829
        %926 = vmatprep.subr.mxu0 0.0
        %927 = vmatpush1.msra.mxu0 %v828
        %928 = vmatprep.subr.mxu0 0.0
        %929 = vmatpush1.msra.mxu0 %v827
        %930 = vmatprep.subr.mxu0 0.0
        %931 = vmatpush1.msra.mxu0 %v826
        %932 = vmatprep.subr.mxu0 0.0
        %933 = vmatpush1.msra.mxu0 %v825
        %934 = vmatprep.subr.mxu0 0.0
        %935 = vmatpush1.msra.mxu0 %v824
        %936 = vmatprep.subr.mxu0 0.0
        %937 = vmatpush1.msra.mxu0 %v823
        %938 = vmatprep.subr.mxu0 0.0
        %939 = vmatpush1.msra.mxu0 %v822
        %940 = vmatprep.subr.mxu0 0.0
        %941 = vmatpush1.msra.mxu0 %v821
        %942 = vmatprep.subr.mxu0 0.0
        %943 = vmatpush1.msra.mxu0 %v820
        %944 = vmatprep.subr.mxu0 0.0
        %945 = vmatpush1.msra.mxu0 %v819
        %946 = vmatprep.subr.mxu0 0.0
        %947 = vmatpush2.msra.mxu0 0.0
        %948 = vmatprep.subr.mxu0 0.0
        %949 = vmatpush2.msra.mxu0 0.0
        %950 = vmatprep.subr.mxu0 0.0
        %951 = vmatpush2.msra.mxu0 0.0
        %952 = vmatprep.subr.mxu0 0.0
        %953 = vmatpush2.msra.mxu0 0.0
        %954 = vmatprep.subr.mxu0 0.0
        %955 = vmatpush2.msra.mxu0 0.0
        %956 = vmatprep.subr.mxu0 0.0
        %957 = vmatpush2.msra.mxu0 0.0
        %958 = vmatprep.subr.mxu0 0.0
        %959 = vmatpush2.msra.mxu0 0.0
        %960 = vmatprep.subr.mxu0 0.0
        %961 = vmatpush2.msra.mxu0 0.0
        %962 = vmatprep.subr.mxu0 0.0
        %963 = vmatpush2.msra.mxu0 0.0
        %964 = vmatprep.subr.mxu0 0.0
        %965 = vmatpush2.msra.mxu0 0.0
        %966 = vmatprep.subr.mxu0 0.0
        %967 = vmatpush2.msra.mxu0 0.0
        %968 = vmatprep.subr.mxu0 0.0
        %969 = vmatpush2.msra.mxu0 0.0
        %970 = vmatprep.subr.mxu0 0.0
        %971 = vmatpush2.msra.mxu0 0.0
        %972 = vmatprep.subr.mxu0 0.0
        %973 = vmatpush2.msra.mxu0 0.0
        %974 = vmatprep.subr.mxu0 0.0
        %975 = vmatpush2.msra.mxu0 0.0
        %976 = vmatprep.subr.mxu0 0.0
        %977 = vmatpush2.msra.mxu0 0.0
        %978 = vmatprep.mubr.f32.mxu0 0.0
        %979 = vmatmul.mubr.f32.gmra.mxu0 %v817
        %v980 = vpop.f32.mrf.mxu0
        %v981 = vadd.f32 %v906, %v980
        %v982 = vpop.f32.mrf.mxu0
        %983 = vmatprep.mubr.f32.mxu0 0.0
        %984 = vmatmul.mubr.f32.gmra.mxu0 %v818
        %v985 = vpop.f32.mrf.mxu0
        %v986 = vadd.f32 %v911, %v985
        %v987 = vpop.f32.mrf.mxu0
        %988 = vdwg.mxu0
        %989 = vst.msk [vmem:[%s326] sm:$0xff] %vm445, %v981
        %990 = vst.msk [vmem:[%s326 + $0x8] sm:$0xff] %vm445, %v986
        %s991 = sand.u32 %s225, 1
        %s992 = scalar_lea.sflag [#allocation3], %s991
        %s993 = sand.u32 %s225, 1
        %s994 = smul.addr %s993, 16
        %s995 = scalar_lea.vmem [#allocation2], %s994
        // Predicated region
        $region57: #{tpu_custom_call.1} parent=55 // pred_check
          %p996 = pneg %p235
        $region58: #{tpu_custom_call.1} parent=55 // pred_check_branch
          %998 = sbr.rel (%p996) target = $region60
        $region59: #{tpu_custom_call.1} parent=55 // pred_region
          %s999 = smul.u32 2, %s23
          %s1001 = ssub.s32 256, 256
          %1002 = vsyncadd %s992, %s1001
          %s1003 = smul.addr %s999, 128
          %s1004 = scalar_lea.hbm %s9, %s1003
          %s1005 = sshll.u32 %s995, 4
          %s1006 = int_to_ptr.vmem [resolvable:$true] %s1005
          %1011 = dma.vmem_to_hbm [thread:$0]  %s1006, 256, %s1004, %s992, 128, 128, 8
        $region60: #{tpu_custom_call.1} parent=55 // pred_fallthru
          _
      $region56: #{tpu_custom_call.1} parent=5 // pred_fallthru
        _
      %p1012 = scmp.le.s32.totalorder 2, %s18
      // Predicated region
      $region61: #{tpu_custom_call.1} parent=5 // pred_check
        %p1013 = pneg %p1012
      $region62: #{tpu_custom_call.1} parent=5 // pred_check_branch
        %1015 = sbr.rel (%p1013) target = $region64
      $region63: #{tpu_custom_call.1} parent=5 // pred_region
        %s1016 = ssub.s32 %s18, 2
        // Predicated region
        $region65: #{tpu_custom_call.1} parent=63 // pred_check
          %p1017 = pneg %p241
        $region66: #{tpu_custom_call.1} parent=63 // pred_check_branch
          %1019 = sbr.rel (%p1017) target = $region68
        $region67: #{tpu_custom_call.1} parent=63 // pred_region
          %s1020 = sand.u32 %s226, 1
          %s1021 = scalar_lea.sflag [#allocation3], %s1020
          %s1022 = sand.u32 %s226, 1
          %s1023 = smul.addr %s1022, 16
          %s1024 = scalar_lea.vmem [#allocation2], %s1023
          %1025 = dma.done %s1021, 256
        $region68: #{tpu_custom_call.1} parent=63 // pred_fallthru
          _
      $region64: #{tpu_custom_call.1} parent=5 // pred_fallthru
        _
    $region6: #{tpu_custom_call.1} parent=1 // loop_footer
      %s22 = sadd.s32 1, %s18
    $region7: #{tpu_custom_call.1} parent=1 // loop_footer_branch
      %17 = sbr.rel target = $region3
    $region8: #{tpu_custom_call.1} parent=1 // loop_exit
      _
    %1026 = vsyncpa [#allocation3], 1
    %s1027 = scalar_lea.sflag [#allocation3], 1
    %1028 = vsyncpa %s1027, 1

</llo_original>
